<compile_context>
chip_gen: v6e
topology: v6e:2x2x1
jax: 0.10.0
libtpu: 0.0.40
codegen_flags: <defaults>
</compile_context>

<pallas_src>
import functools

import jax
import jax.numpy as jnp
from jax.experimental import pallas as pl
from jax.experimental.pallas import tpu as pltpu


# --------------------------------------------------------------------------- #
# Kernels
# --------------------------------------------------------------------------- #
def _se_block_kernel(x_ref, wt_ref, b_ref, o_ref, *, inv_hw):
    # x_ref: (Bt, C, HW)   wt_ref: (C, C) pre-transposed (= W.T)   b_ref: (1, C)
    # Squeeze: mean over the spatial (lane) axis, accumulated in f32.
    pooled = jnp.sum(x_ref[...], axis=-1, dtype=jnp.float32) * inv_hw      # (Bt, C)
    # Excite: 1x1 conv on a 1x1 map == linear layer.
    s = jnp.dot(pooled, wt_ref[...], preferred_element_type=jnp.float32)   # (Bt, C)
    att = jax.nn.sigmoid(s + b_ref[...])                                   # (Bt, C)
    # Scale: re-read the tile from its VMEM buffer (cheap vld) so no whole-tile
    # f32 temporary has to stay live across the matmul / sigmoid.
    o_ref[...] = (x_ref[...].astype(jnp.float32) * att[:, :, None]).astype(o_ref.dtype)


def _scale_kernel(att_ref, x_ref, o_ref, *, ct):
    # Fallback scale pass: att_ref is the full (B, C) attention (tiny, resident),
    # x_ref / o_ref are (1, Ct, HW) channel tiles of one batch sample.
    b = pl.program_id(0)
    c = pl.program_id(1)
    a = att_ref[pl.ds(b, 1), pl.ds(c * ct, ct)]                            # (1, Ct)
    o_ref[...] = (x_ref[...].astype(jnp.float32) * a[:, :, None]).astype(o_ref.dtype)


# --------------------------------------------------------------------------- #
# Hardware capability query (safe fallbacks if unavailable)
# --------------------------------------------------------------------------- #
def _tpu_caps():
    vmem_cap = 64 << 20   # conservative default (v7x physical VMEM)
    num_tc = 1
    try:
        info = pltpu.get_tpu_info()
        vmem_cap = int(getattr(info, "vmem_capacity_bytes", vmem_cap))
        for name in ("num_cores", "core_count", "tensorcore_count"):
            v = getattr(info, name, None)
            if v:
                num_tc = max(num_tc, int(v))
                break
    except Exception:
        pass
    try:
        kind = jax.devices()[0].device_kind.lower()
        if any(t in kind for t in ("v4", "v5p", "v7")):
            num_tc = max(num_tc, 2)
    except Exception:
        pass
    return vmem_cap, num_tc


# --------------------------------------------------------------------------- #
# Wrapper
# --------------------------------------------------------------------------- #
def se_block(x, weight, bias):
    """Squeeze-and-excitation forward.

    x:      (B, C, *spatial)   2D or 3D spatial dims (mode='2d' / '3d')
    weight: (C, C)             1x1-conv weight, PyTorch [out, in] layout
    bias:   (C,)
    returns array of the same shape/dtype as x.
    """
    B, C = int(x.shape[0]), int(x.shape[1])
    HW = 1
    for d in x.shape[2:]:
        HW *= int(d)

    x_flat = x.reshape(B, C, HW)
    wt = weight.astype(jnp.float32).T          # kernel computes pooled @ W.T
    bias2d = bias.astype(jnp.float32).reshape(1, C)
    inv_hw = 1.0 / HW

    itemsize = jnp.dtype(x.dtype).itemsize
    per_sample_bytes = C * HW * itemsize

    vmem_cap, num_tc = _tpu_caps()
    usable = int(0.85 * vmem_cap)                         # never exceed physical VMEM
    w_bytes = C * C * 4
    b_bytes = C * 4
    reserved = 2 * (w_bytes + b_bytes) + (2 << 20)        # dbl-buffered params + scratch headroom
    soft_cap = (16 << 20) if vmem_cap >= (96 << 20) else (8 << 20)
    tile_budget = min(soft_cap, max((usable - reserved) // 4, 0))   # 4 = in+out double-buffered

    # ----- Fallback: a single sample's (C, HW) slab does not fit the budget. -----
    if per_sample_bytes > tile_budget:
        out_flat = _se_block_large(x_flat, wt, bias2d, inv_hw,
                                   max(tile_budget, 1 << 20), usable, x.dtype)
        return out_flat.reshape(x.shape)

    # ----- Main path: batch-tiled, fused single pass. -----
    # Largest divisor of B whose tile fits the budget; on multi-TC chips keep
    # >= 2 grid steps so the 'parallel' grid axis can shard across cores.
    Bt = 1
    for d in range(1, B + 1):
        if B % d:
            continue
        if d * per_sample_bytes > tile_budget:
            continue
        if num_tc >= 2 and B >= 2 and (B // d) < 2:
            continue
        Bt = d
    grid = (B // Bt,)

    tile_bytes = Bt * per_sample_bytes
    vmem_limit = int(min(max(4 * tile_bytes + reserved, 16 << 20), usable))

    kernel = functools.partial(_se_block_kernel, inv_hw=inv_hw)
    out_flat = pl.pallas_call(
        kernel,
        out_shape=jax.ShapeDtypeStruct((B, C, HW), x.dtype),
        grid_spec=pltpu.PrefetchScalarGridSpec(
            num_scalar_prefetch=0,
            grid=grid,
            in_specs=[
                pl.BlockSpec((Bt, C, HW), lambda b: (b, 0, 0)),
                pl.BlockSpec((C, C), lambda b: (0, 0)),
                pl.BlockSpec((1, C), lambda b: (0, 0)),
            ],
            out_specs=pl.BlockSpec((Bt, C, HW), lambda b: (b, 0, 0)),
        ),
        compiler_params=pltpu.CompilerParams(
            dimension_semantics=("parallel",),
            vmem_limit_bytes=vmem_limit,
        ),
    )(x_flat, wt, bias2d)
    return out_flat.reshape(x.shape)


def _se_block_large(x_flat, wt, bias2d, inv_hw, tile_budget, usable, out_dtype):
    """Large-activation fallback: JAX pooling/att + channel-tiled Pallas scale."""
    B, C, HW = (int(s) for s in x_flat.shape)
    pooled = jnp.sum(x_flat, axis=-1, dtype=jnp.float32) * inv_hw          # (B, C)
    att = jax.nn.sigmoid(pooled @ wt + bias2d)                             # (B, C) f32

    itemsize = jnp.dtype(x_flat.dtype).itemsize
    Ct = 1
    for d in range(1, C + 1):
        if C % d == 0 and d * HW * itemsize <= tile_budget:
            Ct = d
    # TODO(synk): also tile the HW axis if a single (1, HW) row ever exceeds the budget.

    tile_bytes = Ct * HW * itemsize
    att_bytes = B * C * 4
    vmem_limit = int(min(max(4 * tile_bytes + 2 * att_bytes + (2 << 20), 16 << 20), usable))

    kernel = functools.partial(_scale_kernel, ct=Ct)
    return pl.pallas_call(
        kernel,
        out_shape=jax.ShapeDtypeStruct((B, C, HW), out_dtype),
        grid_spec=pltpu.PrefetchScalarGridSpec(
            num_scalar_prefetch=0,
            grid=(B, C // Ct),
            in_specs=[
                pl.BlockSpec((B, C), lambda b, c: (0, 0)),          # att, tiny, resident
                pl.BlockSpec((1, Ct, HW), lambda b, c: (b, c, 0)),
            ],
            out_specs=pl.BlockSpec((1, Ct, HW), lambda b, c: (b, c, 0)),
        ),
        compiler_params=pltpu.CompilerParams(
            dimension_semantics=("parallel", "parallel"),
            vmem_limit_bytes=vmem_limit,
        ),
    )(att, x_flat)


# --------------------------------------------------------------------------- #
# Reference + test
# --------------------------------------------------------------------------- #
def se_block_ref(x, weight, bias):
    spatial_axes = tuple(range(2, x.ndim))
    pooled = jnp.mean(x.astype(jnp.float32), axis=spatial_axes)            # (B, C)
    s = pooled @ weight.T.astype(jnp.float32) + bias.astype(jnp.float32)[None, :]
    att = jax.nn.sigmoid(s).reshape(s.shape + (1,) * len(spatial_axes))    # (B, C, 1, ...)
    return (x.astype(jnp.float32) * att).astype(x.dtype)


if __name__ == "__main__":
    key = jax.random.PRNGKey(0)
    kx, kw, kb = jax.random.split(key, 3)

    B, C, H, W = 2, 4, 16, 16
    x = jax.random.normal(kx, (B, C, H, W), dtype=jnp.float32)
    # Deterministic synthetic parameters for the 1x1 conv (c -> c) with bias.
    weight = jax.random.normal(kw, (C, C), dtype=jnp.float32) * 0.1
    bias = jax.random.normal(kb, (C,), dtype=jnp.float32) * 0.1

    out = se_block(x, weight, bias)
    out = jax.block_until_ready(out)

    ref = se_block_ref(x, weight, bias)
    assert out.shape == (B, C, H, W)
    assert jnp.allclose(out, ref, atol=1e-5, rtol=1e-5)

    print("KERNEL_OK")
</pallas_src>

<mosaic_0001>
module attributes {stable_mosaic.version = 11 : i64} {
  func.func @_se_block_kernel(%arg0: i32, %arg1: memref<2x4x256xf32, #tpu.memory_space<vmem>>, %arg2: memref<4x4xf32, #tpu.memory_space<vmem>>, %arg3: memref<1x4xf32, #tpu.memory_space<vmem>>, %arg4: memref<2x4x256xf32, #tpu.memory_space<vmem>>) attributes {dimension_semantics = [#tpu.dimension_semantics<parallel>], iteration_bounds = array<i64: 1>, scalar_prefetch = 0 : i64, scratch_operands = 0 : i64, tpu.core_type = #tpu.core_type<tc>, window_params = [{transform_indices = @transform_0, window_bounds = array<i64: 2, 4, 256>}, {pipeline_mode = #tpu.pipeline_mode<synchronous>, transform_indices = @transform_1, window_bounds = array<i64: 4, 4>}, {pipeline_mode = #tpu.pipeline_mode<synchronous>, transform_indices = @transform_2, window_bounds = array<i64: 1, 4>}, {transform_indices = @transform_3, window_bounds = array<i64: 2, 4, 256>}]} {
    %c0 = arith.constant 0 : index
    %c0_0 = arith.constant 0 : index
    %c0_1 = arith.constant 0 : index
    %0 = vector.load %arg1[%c0, %c0_0, %c0_1] : memref<2x4x256xf32, #tpu.memory_space<vmem>>, vector<2x4x256xf32>
    %cst = arith.constant dense<0.000000e+00> : vector<2x4xf32>
    %1 = vector.multi_reduction <add>, %0, %cst [2] : vector<2x4x256xf32> to vector<2x4xf32>
    %cst_2 = arith.constant 3.906250e-03 : f32
    %2 = vector.broadcast %cst_2 : f32 to vector<2x4xf32>
    %3 = arith.mulf %1, %2 : vector<2x4xf32>
    %c0_3 = arith.constant 0 : index
    %c0_4 = arith.constant 0 : index
    %4 = vector.load %arg2[%c0_3, %c0_4] : memref<4x4xf32, #tpu.memory_space<vmem>>, vector<4x4xf32>
    %cst_5 = arith.constant dense<0.000000e+00> : vector<2x4xf32>
    %5 = tpu.matmul %3, %4, %cst_5 {dimension_numbers = #tpu.dot_dimension_numbers<[1], [0], [0], [1], [0, 0, 1, 1], [], []>} : vector<2x4xf32>, vector<4x4xf32>, vector<2x4xf32> -> vector<2x4xf32>
    %c0_6 = arith.constant 0 : index
    %c0_7 = arith.constant 0 : index
    %6 = vector.load %arg3[%c0_6, %c0_7] : memref<1x4xf32, #tpu.memory_space<vmem>>, vector<1x4xf32>
    %7 = vector.broadcast %6 : vector<1x4xf32> to vector<2x4xf32>
    %8 = arith.addf %5, %7 : vector<2x4xf32>
    %9 = arith.negf %8 : vector<2x4xf32>
    %10 = math.exp %9 : vector<2x4xf32>
    %cst_8 = arith.constant 1.000000e+00 : f32
    %11 = vector.broadcast %cst_8 : f32 to vector<2x4xf32>
    %12 = arith.addf %11, %10 : vector<2x4xf32>
    %13 = arith.divf %11, %12 : vector<2x4xf32>
    %c0_9 = arith.constant 0 : index
    %c0_10 = arith.constant 0 : index
    %c0_11 = arith.constant 0 : index
    %14 = vector.load %arg1[%c0_9, %c0_10, %c0_11] : memref<2x4x256xf32, #tpu.memory_space<vmem>>, vector<2x4x256xf32>
    %15 = vector.shape_cast %13 : vector<2x4xf32> to vector<2x4x1xf32>
    %16 = vector.broadcast %15 : vector<2x4x1xf32> to vector<2x4x256xf32>
    %17 = arith.mulf %14, %16 : vector<2x4x256xf32>
    %c0_12 = arith.constant 0 : index
    %c0_13 = arith.constant 0 : index
    %c0_14 = arith.constant 0 : index
    %18 = vector.load %arg4[%c0_12, %c0_13, %c0_14] : memref<2x4x256xf32, #tpu.memory_space<vmem>>, vector<2x4x256xf32>
    tpu.vector_store %arg4[%c0_12, %c0_13, %c0_14], %17 {strides = array<i32>} : memref<2x4x256xf32, #tpu.memory_space<vmem>>, vector<2x4x256xf32>,
    return
  }
  func.func @transform_0(%arg0: i32) -> (i32, i32, i32) {
    %c0_i32 = arith.constant 0 : i32
    %c0_i32_0 = arith.constant 0 : i32
    %c0_i32_1 = arith.constant 0 : i32
    return %arg0, %c0_i32, %c0_i32_0 : i32, i32, i32
  }
  func.func @transform_1(%arg0: i32) -> (i32, i32) {
    %c0_i32 = arith.constant 0 : i32
    %c0_i32_0 = arith.constant 0 : i32
    %c0_i32_1 = arith.constant 0 : i32
    return %c0_i32, %c0_i32_0 : i32, i32
  }
  func.func @transform_2(%arg0: i32) -> (i32, i32) {
    %c0_i32 = arith.constant 0 : i32
    %c0_i32_0 = arith.constant 0 : i32
    %c0_i32_1 = arith.constant 0 : i32
    return %c0_i32, %c0_i32_0 : i32, i32
  }
  func.func @transform_3(%arg0: i32) -> (i32, i32, i32) {
    %c0_i32 = arith.constant 0 : i32
    %c0_i32_0 = arith.constant 0 : i32
    %c0_i32_1 = arith.constant 0 : i32
    return %arg0, %c0_i32, %c0_i32_0 : i32, i32, i32
  }
}

</mosaic_0001>

<llo_original>
// kernel: tpu_custom_call.1
$region0: #{tpu_custom_call.1}
  #allocation0 [shape = 'u32[]', space=smem, size = 0x4, offset = 0x4, fixed_abs, tag = 'smem constant byte address 0x4 - core index']
  #allocation1 [shape = 'u32[144,128]{1,0:T(1,128)}', space=vmem, size = 0x12000, scoped, tag = 'internal scratch']
  %s0 = inlined_call_operand.hbm [shape: f32[2,4,256], index: 0, kind: input, shape index: {}]
  %s1 = inlined_call_operand.hbm [shape: f32[4,4], index: 1, kind: input, shape index: {}]
  %s2 = inlined_call_operand.vmem [shape: f32[1,4], index: 2, kind: input, shape index: {}]
  %s3 = inlined_call_operand.hbm [shape: f32[2,4,256], index: 3, kind: output, shape index: {}]
  %s4 = sld [smem:[#allocation0]]
  $region30: #{tpu_custom_call.1} parent=0
    _
  %s6 = ssub.s32 1, %s4
  %s7 = scalar_select 0, %s6, %s4
  $region1: #{tpu_custom_call.1} parent=0
    #allocation2 [shape = 'u8[8192]{0}', space=vmem, size = 0x2000, scoped, tag = 'input window, operand 0, single buffered']
    #allocation3 [shape = 's32[1]{0}', space=sflag, size = 0x4, scoped, tag = 'scoped memory for tpu_custom_call.1']
    #allocation4 [shape = 's32[1]{0}', space=sflag, size = 0x4, scoped, tag = 'scoped memory for tpu_custom_call.1']
    #allocation5 [shape = 'u8[2048]{0}', space=vmem, size = 0x800, scoped, tag = 'input window, operand 1, single buffered']
    #allocation6 [shape = 's32[1]{0}', space=sflag, size = 0x4, scoped, tag = 'scoped memory for tpu_custom_call.1']
    #allocation7 [shape = 'u8[8192]{0}', space=vmem, size = 0x2000, scoped, tag = 'output window, operand 0, single buffered']
    %8 = vsyncpa [#allocation3], 0
    %9 = vsyncpa [#allocation6], 0
    %10 = vsyncpa [#allocation4], 0
    // Predicated region
    $region2: #{tpu_custom_call.1} parent=1 // pred_check
      _
    $region3: #{tpu_custom_call.1} parent=1 // pred_check_branch
      %12 = sbr.rel (0) target = $region5
    $region4: #{tpu_custom_call.1} parent=1 // pred_region
      %s14 = ssub.s32 256, 256
      %15 = vsyncadd [#allocation3], %s14
      %s16 = sshll.u32 [#allocation2], 4
      %s17 = int_to_ptr.vmem [resolvable:$true] %s16
      %22 = dma.hbm_to_vmem [thread:$0]  %s0, 256, %s17, [#allocation3], 128, 128, 8
    $region5: #{tpu_custom_call.1} parent=1 // pred_fallthru
      _
    // Predicated region
    $region6: #{tpu_custom_call.1} parent=1 // pred_check
      _
    $region7: #{tpu_custom_call.1} parent=1 // pred_check_branch
      %24 = sbr.rel (0) target = $region9
    $region8: #{tpu_custom_call.1} parent=1 // pred_region
      %s26 = ssub.s32 64, 64
      %27 = vsyncadd [#allocation6], %s26
      %s29 = sshll.u32 [#allocation5], 4
      %s30 = int_to_ptr.vmem [resolvable:$true] %s29
      %32 = dma.hbm_to_vmem [thread:$0]  %s1, 64, %s30, [#allocation6]
    $region9: #{tpu_custom_call.1} parent=1 // pred_fallthru
      _
    // Predicated region
    $region10: #{tpu_custom_call.1} parent=1 // pred_check
      _
    $region11: #{tpu_custom_call.1} parent=1 // pred_check_branch
      %34 = sbr.rel (0) target = $region13
    $region12: #{tpu_custom_call.1} parent=1 // pred_region
      _
    $region13: #{tpu_custom_call.1} parent=1 // pred_fallthru
      _
    // Predicated region
    $region14: #{tpu_custom_call.1} parent=1 // pred_check
      _
    $region15: #{tpu_custom_call.1} parent=1 // pred_check_branch
      %36 = sbr.rel (0) target = $region17
    $region16: #{tpu_custom_call.1} parent=1 // pred_region
      %37 = dma.done [#allocation3], 256
    $region17: #{tpu_custom_call.1} parent=1 // pred_fallthru
      _
    // Predicated region
    $region18: #{tpu_custom_call.1} parent=1 // pred_check
      _
    $region19: #{tpu_custom_call.1} parent=1 // pred_check_branch
      %39 = sbr.rel (0) target = $region21
    $region20: #{tpu_custom_call.1} parent=1 // pred_region
      %40 = dma.done [#allocation6], 64
    $region21: #{tpu_custom_call.1} parent=1 // pred_fallthru
      _
    %v41 = vld [vmem:[#allocation2] sm:$0xff]
    %v42 = vld [vmem:[#allocation2 + $0x8] sm:$0xff]
    %v45 = vcombine.high %v41, %v41
    %v46 = vcombine.high %v42, %v42
    %vm49 = vcmask 1043456
    %v50 = vsel %vm49, %v41, 0.0
    %v51 = vsel %vm49, %v45, 0.0
    %v52 = vadd.f32 %v50, %v51
    %53 = vadd.xlane.f32.xlu0 %v52
    %v54 = vpop.xlane.xlu0 %53
    %v55 = vsel %vm49, %v42, 0.0
    %v56 = vsel %vm49, %v46, 0.0
    %v57 = vadd.f32 %v55, %v56
    %58 = vadd.xlane.f32.xlu0 %v57
    %v59 = vpop.xlane.xlu0 %58
    %v60 = vmul.f32 %v54, 0.00390625
    %v61 = vmul.f32 %v59, 0.00390625
    %v62 = vld [vmem:[#allocation5] sm:$0xf]
    %v63 = vld [vmem:[%s2] sm:$0x1]
    %v65 = vlaneseq
    %v66 = vshrl.u32 %v65, 7
    %v67 = vsub.s32 0, %v66
    %v68 = vrot.slane %v63, %v67
    %v72 = vlaneseq
    %v73 = vand.u32 %v72, 127
    %v74 = vlaneseq
    %v75 = vshrl.u32 %v74, 7
    %v76 = vsub.s32 %v73, %v75
    %v77 = vrot.slane %v60, %v76
    %v78 = vlaneseq
    %v79 = vshrl.u32 %v78, 7
    %v80 = vsub.s32 %v73, %v79
    %v81 = vrot.slane %v61, %v80
    %vm82 = vcmask 1041409
    %v83 = vsel %vm82, %v81, %v77
    %vm84 = vcmask 31744
    %v85 = vsel %vm84, %v83, 0
    %v88 = vsel %vm49, %v62, 0
    %90 = vmatprep.subr.mxu0 0.0
    %91 = vmatpush1.msra.mxu0 0.0
    %92 = vmatprep.subr.mxu0 0.0
    %93 = vmatpush1.msra.mxu0 0.0
    %94 = vmatprep.subr.mxu0 0.0
    %95 = vmatpush1.msra.mxu0 0.0
    %96 = vmatprep.subr.mxu0 0.0
    %97 = vmatpush1.msra.mxu0 0.0
    %98 = vmatprep.subr.mxu0 0.0
    %99 = vmatpush1.msra.mxu0 0.0
    %100 = vmatprep.subr.mxu0 0.0
    %101 = vmatpush1.msra.mxu0 0.0
    %102 = vmatprep.subr.mxu0 0.0
    %103 = vmatpush1.msra.mxu0 0.0
    %104 = vmatprep.subr.mxu0 0.0
    %105 = vmatpush1.msra.mxu0 0.0
    %106 = vmatprep.subr.mxu0 0.0
    %107 = vmatpush1.msra.mxu0 0.0
    %108 = vmatprep.subr.mxu0 0.0
    %109 = vmatpush1.msra.mxu0 0.0
    %110 = vmatprep.subr.mxu0 0.0
    %111 = vmatpush1.msra.mxu0 0.0
    %112 = vmatprep.subr.mxu0 0.0
    %113 = vmatpush1.msra.mxu0 0.0
    %114 = vmatprep.subr.mxu0 0.0
    %115 = vmatpush1.msra.mxu0 0.0
    %116 = vmatprep.subr.mxu0 0.0
    %117 = vmatpush1.msra.mxu0 0.0
    %118 = vmatprep.subr.mxu0 0.0
    %119 = vmatpush1.msra.mxu0 0.0
    %120 = vmatprep.subr.mxu0 0.0
    %121 = vmatpush1.msra.mxu0 %v88
    %122 = vmatprep.subr.mxu0 0.0
    %123 = vmatpush2.msra.mxu0 0.0
    %124 = vmatprep.subr.mxu0 0.0
    %125 = vmatpush2.msra.mxu0 0.0
    %126 = vmatprep.subr.mxu0 0.0
    %127 = vmatpush2.msra.mxu0 0.0
    %128 = vmatprep.subr.mxu0 0.0
    %129 = vmatpush2.msra.mxu0 0.0
    %130 = vmatprep.subr.mxu0 0.0
    %131 = vmatpush2.msra.mxu0 0.0
    %132 = vmatprep.subr.mxu0 0.0
    %133 = vmatpush2.msra.mxu0 0.0
    %134 = vmatprep.subr.mxu0 0.0
    %135 = vmatpush2.msra.mxu0 0.0
    %136 = vmatprep.subr.mxu0 0.0
    %137 = vmatpush2.msra.mxu0 0.0
    %138 = vmatprep.subr.mxu0 0.0
    %139 = vmatpush2.msra.mxu0 0.0
    %140 = vmatprep.subr.mxu0 0.0
    %141 = vmatpush2.msra.mxu0 0.0
    %142 = vmatprep.subr.mxu0 0.0
    %143 = vmatpush2.msra.mxu0 0.0
    %144 = vmatprep.subr.mxu0 0.0
    %145 = vmatpush2.msra.mxu0 0.0
    %146 = vmatprep.subr.mxu0 0.0
    %147 = vmatpush2.msra.mxu0 0.0
    %148 = vmatprep.subr.mxu0 0.0
    %149 = vmatpush2.msra.mxu0 0.0
    %150 = vmatprep.subr.mxu0 0.0
    %151 = vmatpush2.msra.mxu0 0.0
    %152 = vmatprep.subr.mxu0 0.0
    %153 = vmatpush2.msra.mxu0 0.0
    %154 = vmatprep.mubr.f32.mxu0 0.0
    %155 = vmatmul.mubr.f32.gmra.mxu0 %v85
    %v156 = vpop.f32.mrf.mxu0
    %v157 = vadd.f32 %v68, %v156
    %v158 = vpop.f32.mrf.mxu0
    %159 = vdwg.mxu0
    %v160 = vxor.u32 %v157, 2147483648
    %v161 = vmul.f32 %v160, 1.442695
    %v162 = vpow.pop %v161
    %v163 = vadd.f32 %v162, 1.0
    %v164 = vrcp.pop %v163
    %v165 = vmul.f32 1.0, %v164
    %v166 = vlaneseq
    %v167 = vshrl.u32 %v166, 7
    %v168 = vsub.s32 0, %v167
    %v169 = vrot.slane %v165, %v168
    %171 = vbcast.lane.b32.xlu0 %v169, 256
    %v172 = vpop.permute.xlu0 %171
    %v173 = vlaneseq
    %v174 = vshrl.u32 %v173, 7
    %v175 = vsub.s32 1, %v174
    %v176 = vrot.slane %v165, %v175
    %178 = vbcast.lane.b32.xlu0 %v176, 256
    %v179 = vpop.permute.xlu0 %178
    %v183 = vunpack.c.l.s4 839922192
    %v184 = vunpack.c.0.s8 %v183
    %v185 = vlaneseq
    %v186 = vshrl.u32 %v185, 7
    %v187 = vsub.s32 %v184, %v186
    %v188 = vrot.slane %v172, %v187
    %v190 = vunpack.c.l.s4 839922192
    %v191 = vunpack.c.0.s8 %v190
    %v192 = vlaneseq
    %v193 = vshrl.u32 %v192, 7
    %v194 = vsub.s32 %v191, %v193
    %v195 = vrot.slane %v179, %v194
    %v198 = vmul.f32 %v41, %v188
    %v199 = vmul.f32 %v42, %v195
    %200 = vst [vmem:[#allocation7] sm:$0xff] %v198
    %201 = vst [vmem:[#allocation7 + $0x8] sm:$0xff] %v199
    // Predicated region
    $region22: #{tpu_custom_call.1} parent=1 // pred_check
      _
    $region23: #{tpu_custom_call.1} parent=1 // pred_check_branch
      %203 = sbr.rel (0) target = $region25
    $region24: #{tpu_custom_call.1} parent=1 // pred_region
      %s205 = ssub.s32 256, 256
      %206 = vsyncadd [#allocation4], %s205
      %s207 = sshll.u32 [#allocation7], 4
      %s208 = int_to_ptr.vmem [resolvable:$true] %s207
      %213 = dma.vmem_to_hbm [thread:$0]  %s208, 256, %s3, [#allocation4], 128, 128, 8
    $region25: #{tpu_custom_call.1} parent=1 // pred_fallthru
      _
    // Predicated region
    $region26: #{tpu_custom_call.1} parent=1 // pred_check
      _
    $region27: #{tpu_custom_call.1} parent=1 // pred_check_branch
      %215 = sbr.rel (0) target = $region29
    $region28: #{tpu_custom_call.1} parent=1 // pred_region
      %216 = dma.done [#allocation4], 256
    $region29: #{tpu_custom_call.1} parent=1 // pred_fallthru
      _
    %217 = vsyncpa [#allocation3], 1
    %218 = vsyncpa [#allocation6], 1
    %219 = vsyncpa [#allocation4], 1

</llo_original>
